<compile_context>
chip_gen: v5e
topology: v5e:2x2
jax: 0.10.0
libtpu: 0.0.40
codegen_flags: <defaults>
</compile_context>

<pallas_src>
from functools import partial

import numpy as np
import jax
import jax.numpy as jnp
from jax.experimental import pallas as pl
from jax.experimental.pallas import tpu as pltpu


def to_2tuple(v):
    return tuple(v) if isinstance(v, (tuple, list)) else (v, v)


def _round_up(x, m):
    return ((x + m - 1) // m) * m


def _cdiv(a, b):
    return -(-a // b)


def _patch_embed_kernel(x_ref, w_ref, p_ref, o_ref, *, eps):
    # x_ref : (TM, D)  streamed bf16 patch-row tile (D = C*K*K, un-padded)
    # w_ref : (D, E)   resident bf16 flattened conv weight
    # p_ref : (3, E)   f32 [conv bias ; LN gamma ; LN beta], resident
    # o_ref : (TM, E)  lane-dense output tile
    y = jnp.dot(x_ref[...], w_ref[...],
                preferred_element_type=jnp.float32)          # MXU bf16 -> f32
    params = p_ref[...].astype(jnp.float32)
    y = y + params[0:1, :]                                   # conv bias

    # One-pass LayerNorm statistics over E: var = E[y^2] - mean^2.
    inv_e = jnp.float32(1.0 / y.shape[-1])
    s1 = jnp.sum(y, axis=-1, keepdims=True) * inv_e
    s2 = jnp.sum(y * y, axis=-1, keepdims=True) * inv_e
    var = jnp.maximum(s2 - s1 * s1, 0.0)
    yn = (y - s1) * jax.lax.rsqrt(var + jnp.float32(eps))
    o_ref[...] = (yn * params[1:2, :] + params[2:3, :]).astype(o_ref.dtype)


@partial(jax.jit,
         static_argnames=("patch_size", "kernel_size", "overlap", "eps",
                          "block_m", "stream_dtype"))
def patch_embed_forward(x, weight, bias, gamma, beta, *,
                        patch_size, kernel_size=3, overlap=True,
                        eps=1e-5, block_m=512, stream_dtype=jnp.bfloat16):
    """JAX/Pallas equivalent of PatchEmbed.forward: (B,C,H,W) -> (B, H/P*W/P, E)."""
    B, C, Hin, Win = x.shape
    PH, PW = to_2tuple(patch_size)
    assert Hin % PH == 0 and Win % PW == 0
    Ho, Wo = Hin // PH, Win // PW
    E = weight.shape[0]
    if overlap:
        KH = KW = int(kernel_size)
        pad_h, pad_w = KH // 2, KW // 2
    else:
        KH, KW = PH, PW
        pad_h = pad_w = 0
    assert weight.shape == (E, C, KH, KW)

    # ---- im2col in the wrapper (feature order c-major, then kh, then kw, so it
    #      matches torch weight.reshape(E, C*KH*KW)).  Cast to the streaming
    #      dtype first so the layout shuffle moves half the bytes. ----
    xs = x.astype(stream_dtype)
    if pad_h or pad_w:
        xs = jnp.pad(xs, ((0, 0), (0, 0), (pad_h, pad_h), (pad_w, pad_w)))
    taps = []
    for kh in range(KH):
        for kw in range(KW):
            taps.append(xs[:, :,
                           kh: kh + (Ho - 1) * PH + 1: PH,
                           kw: kw + (Wo - 1) * PW + 1: PW])
    pt = jnp.stack(taps, axis=2)                 # (B, C, KH*KW, Ho, Wo)
    pt = pt.transpose(0, 3, 4, 1, 2)             # (B, Ho, Wo, C, KH*KW)
    D = C * KH * KW
    L = Ho * Wo
    M = B * L
    patches = pt.reshape(M, D)                   # no zero-padding of D

    # ---- Row-tile selection: minimal padding, even step count for v7x's two
    #      TensorCores, sublane-aligned tile height. ----
    n_steps = max(1, _cdiv(M, int(block_m)))
    if M >= 16:
        n_steps = max(n_steps, 2)                # keep both v7x cores busy
    if n_steps > 1 and n_steps % 2:
        n_steps += 1                             # even split across 2 TCs
    tm = _round_up(_cdiv(M, n_steps), 8)
    Mp = n_steps * tm
    if Mp > M:
        patches = jnp.pad(patches, ((0, Mp - M), (0, 0)))

    wf = weight.reshape(E, D).T.astype(stream_dtype)             # (D, E) bf16
    params = jnp.stack([bias, gamma, beta]).astype(jnp.float32)  # (3, E) f32

    out = pl.pallas_call(
        partial(_patch_embed_kernel, eps=float(eps)),
        out_shape=jax.ShapeDtypeStruct((Mp, E), x.dtype),
        grid_spec=pltpu.PrefetchScalarGridSpec(
            num_scalar_prefetch=0,
            grid=(n_steps,),
            in_specs=[
                pl.BlockSpec((tm, D), lambda i: (i, 0)),   # streamed row tiles
                pl.BlockSpec((D, E), lambda i: (0, 0)),    # resident weight
                pl.BlockSpec((3, E), lambda i: (0, 0)),    # bias/gamma/beta
            ],
            out_specs=pl.BlockSpec((tm, E), lambda i: (i, 0)),
        ),
        compiler_params=pltpu.CompilerParams(
            dimension_semantics=("parallel",),
        ),
    )(patches, wf, params)

    return out[:M].reshape(B, L, E)


class PatchEmbed:
    """Mirror of the PyTorch PatchEmbed module (overlapped Conv2d proj + LayerNorm)."""

    def __init__(self, img_size=224, patch_size=16, kernel_size=3, in_chans=3,
                 embed_dim=768, overlap=True, *, key=None, dtype=jnp.float32):
        img_size = to_2tuple(img_size)
        patch_size = to_2tuple(patch_size)
        assert img_size[0] % patch_size[0] == 0 and img_size[1] % patch_size[1] == 0
        self.img_size = img_size
        self.patch_size = patch_size
        self.H, self.W = img_size[0] // patch_size[0], img_size[1] // patch_size[1]
        self.num_patches = self.H * self.W
        self.kernel_size = int(kernel_size)
        self.overlap = bool(overlap)
        self.embed_dim = int(embed_dim)
        KH, KW = (self.kernel_size, self.kernel_size) if overlap else patch_size
        if key is None:
            key = jax.random.PRNGKey(0)
        kw_, kb_ = jax.random.split(key)
        fan_in = in_chans * KH * KW
        self.proj_weight = (jax.random.normal(kw_, (embed_dim, in_chans, KH, KW), dtype)
                            / np.sqrt(fan_in))
        self.proj_bias = 0.02 * jax.random.normal(kb_, (embed_dim,), dtype)
        self.norm_weight = jnp.ones((embed_dim,), dtype)    # LayerNorm gamma
        self.norm_bias = jnp.zeros((embed_dim,), dtype)     # LayerNorm beta

    def __call__(self, x):
        return patch_embed_forward(
            x, self.proj_weight, self.proj_bias, self.norm_weight, self.norm_bias,
            patch_size=self.patch_size, kernel_size=self.kernel_size,
            overlap=self.overlap)


def _reference_patch_embed(x, weight, bias, gamma, beta, *,
                           patch_size, kernel_size, overlap, eps=1e-5):
    """Pure-JAX reference (lax.conv + layernorm) matching the torch module."""
    PH, PW = to_2tuple(patch_size)
    E = weight.shape[0]
    pad = (kernel_size // 2) if overlap else 0
    y = jax.lax.conv_general_dilated(
        x, weight, window_strides=(PH, PW), padding=[(pad, pad), (pad, pad)],
        dimension_numbers=("NCHW", "OIHW", "NCHW"))
    y = y + bias.reshape(1, E, 1, 1)
    B, _, Ho, Wo = y.shape
    y = y.reshape(B, E, Ho * Wo).transpose(0, 2, 1)
    mean = y.mean(-1, keepdims=True)
    var = ((y - mean) ** 2).mean(-1, keepdims=True)
    return (y - mean) / jnp.sqrt(var + eps) * gamma + beta


if __name__ == "__main__":
    root = jax.random.PRNGKey(0)
    kx, kmod, kg, kb = jax.random.split(root, 4)

    B, C, H, W = 2, 3, 16, 16
    patch, ksize, E = 4, 3, 128   # small shapes, lane-dense embed dim

    x = jax.random.normal(kx, (B, C, H, W), jnp.float32)

    # Overlapped (default) path: Conv2d(k=3, stride=4, pad=1) + LayerNorm.
    module = PatchEmbed(img_size=H, patch_size=patch, kernel_size=ksize,
                        in_chans=C, embed_dim=E, overlap=True, key=kmod)
    module.norm_weight = 1.0 + 0.1 * jax.random.normal(kg, (E,), jnp.float32)
    module.norm_bias = 0.05 * jax.random.normal(kb, (E,), jnp.float32)

    y = jax.block_until_ready(module(x))
    assert y.shape == (B, module.num_patches, E)

    y_ref = _reference_patch_embed(
        x, module.proj_weight, module.proj_bias, module.norm_weight,
        module.norm_bias, patch_size=patch, kernel_size=ksize, overlap=True)
    err = float(jnp.max(jnp.abs(y - y_ref)))
    assert err < 5e-2, f"overlap path mismatch vs reference: max abs err = {err}"

    # Non-overlapping path: Conv2d(k=stride=patch) + LayerNorm.
    module_no = PatchEmbed(img_size=H, patch_size=patch, in_chans=C,
                           embed_dim=E, overlap=False, key=kmod)
    y_no = jax.block_until_ready(module_no(x))
    y_no_ref = _reference_patch_embed(
        x, module_no.proj_weight, module_no.proj_bias, module_no.norm_weight,
        module_no.norm_bias, patch_size=patch, kernel_size=patch, overlap=False)
    err_no = float(jnp.max(jnp.abs(y_no - y_no_ref)))
    assert err_no < 5e-2, f"non-overlap path mismatch: max abs err = {err_no}"

    print("KERNEL_OK")
</pallas_src>

<mosaic_0001>
module attributes {stable_mosaic.version = 11 : i64} {
  func.func @_patch_embed_kernel(%arg0: i32, %arg1: memref<16x27xbf16, #tpu.memory_space<vmem>>, %arg2: memref<27x128xbf16, #tpu.memory_space<vmem>>, %arg3: memref<3x128xf32, #tpu.memory_space<vmem>>, %arg4: memref<16x128xf32, #tpu.memory_space<vmem>>) attributes {dimension_semantics = [#tpu.dimension_semantics<parallel>], iteration_bounds = array<i64: 2>, scalar_prefetch = 0 : i64, scratch_operands = 0 : i64, tpu.core_type = #tpu.core_type<tc>, window_params = [{transform_indices = @transform_0, window_bounds = array<i64: 16, 27>}, {pipeline_mode = #tpu.pipeline_mode<synchronous>, transform_indices = @transform_1, window_bounds = array<i64: 27, 128>}, {pipeline_mode = #tpu.pipeline_mode<synchronous>, transform_indices = @transform_2, window_bounds = array<i64: 3, 128>}, {transform_indices = @transform_3, window_bounds = array<i64: 16, 128>}]} {
    %c0 = arith.constant 0 : index
    %c0_0 = arith.constant 0 : index
    %0 = vector.load %arg1[%c0, %c0_0] : memref<16x27xbf16, #tpu.memory_space<vmem>>, vector<16x27xbf16>
    %c0_1 = arith.constant 0 : index
    %c0_2 = arith.constant 0 : index
    %1 = vector.load %arg2[%c0_1, %c0_2] : memref<27x128xbf16, #tpu.memory_space<vmem>>, vector<27x128xbf16>
    %cst = arith.constant dense<0.000000e+00> : vector<16x128xf32>
    %2 = tpu.matmul %0, %1, %cst {dimension_numbers = #tpu.dot_dimension_numbers<[1], [0], [0], [1], [0, 0, 1, 1], [], []>} : vector<16x27xbf16>, vector<27x128xbf16>, vector<16x128xf32> -> vector<16x128xf32>
    %c0_3 = arith.constant 0 : index
    %c0_4 = arith.constant 0 : index
    %3 = vector.load %arg3[%c0_3, %c0_4] : memref<3x128xf32, #tpu.memory_space<vmem>>, vector<3x128xf32>
    %4 = vector.extract_strided_slice %3 {offsets = [0, 0], sizes = [1, 128], strides = [1, 1]} : vector<3x128xf32> to vector<1x128xf32>
    %5 = vector.broadcast %4 : vector<1x128xf32> to vector<16x128xf32>
    %6 = arith.addf %2, %5 : vector<16x128xf32>
    %cst_5 = arith.constant dense<0.000000e+00> : vector<16xf32>
    %7 = vector.multi_reduction <add>, %6, %cst_5 [1] : vector<16x128xf32> to vector<16xf32>
    %8 = vector.shape_cast %7 : vector<16xf32> to vector<16x1xf32>
    %cst_6 = arith.constant 7.812500e-03 : f32
    %9 = vector.broadcast %cst_6 : f32 to vector<16x1xf32>
    %10 = arith.mulf %8, %9 : vector<16x1xf32>
    %11 = arith.mulf %6, %6 : vector<16x128xf32>
    %cst_7 = arith.constant dense<0.000000e+00> : vector<16xf32>
    %12 = vector.multi_reduction <add>, %11, %cst_7 [1] : vector<16x128xf32> to vector<16xf32>
    %13 = vector.shape_cast %12 : vector<16xf32> to vector<16x1xf32>
    %cst_8 = arith.constant 7.812500e-03 : f32
    %14 = vector.broadcast %cst_8 : f32 to vector<16x1xf32>
    %15 = arith.mulf %13, %14 : vector<16x1xf32>
    %16 = arith.mulf %10, %10 : vector<16x1xf32>
    %17 = arith.subf %15, %16 : vector<16x1xf32>
    %cst_9 = arith.constant 0.000000e+00 : f32
    %18 = vector.broadcast %cst_9 : f32 to vector<16x1xf32>
    %19 = arith.maximumf %17, %18 : vector<16x1xf32>
    %20 = vector.broadcast %10 : vector<16x1xf32> to vector<16x128xf32>
    %21 = arith.subf %6, %20 : vector<16x128xf32>
    %cst_10 = arith.constant 9.99999974E-6 : f32
    %22 = vector.broadcast %cst_10 : f32 to vector<16x1xf32>
    %23 = arith.addf %19, %22 : vector<16x1xf32>
    %24 = math.rsqrt %23 : vector<16x1xf32>
    %25 = vector.broadcast %24 : vector<16x1xf32> to vector<16x128xf32>
    %26 = arith.mulf %21, %25 : vector<16x128xf32>
    %27 = vector.extract_strided_slice %3 {offsets = [1, 0], sizes = [1, 128], strides = [1, 1]} : vector<3x128xf32> to vector<1x128xf32>
    %28 = vector.broadcast %27 : vector<1x128xf32> to vector<16x128xf32>
    %29 = arith.mulf %26, %28 : vector<16x128xf32>
    %30 = vector.extract_strided_slice %3 {offsets = [2, 0], sizes = [1, 128], strides = [1, 1]} : vector<3x128xf32> to vector<1x128xf32>
    %31 = vector.broadcast %30 : vector<1x128xf32> to vector<16x128xf32>
    %32 = arith.addf %29, %31 : vector<16x128xf32>
    %c0_11 = arith.constant 0 : index
    %c0_12 = arith.constant 0 : index
    %33 = vector.load %arg4[%c0_11, %c0_12] : memref<16x128xf32, #tpu.memory_space<vmem>>, vector<16x128xf32>
    tpu.vector_store %arg4[%c0_11, %c0_12], %32 {strides = array<i32>} : memref<16x128xf32, #tpu.memory_space<vmem>>, vector<16x128xf32>,
    return
  }
  func.func @transform_0(%arg0: i32) -> (i32, i32) {
    %c0_i32 = arith.constant 0 : i32
    %c0_i32_0 = arith.constant 0 : i32
    return %arg0, %c0_i32 : i32, i32
  }
  func.func @transform_1(%arg0: i32) -> (i32, i32) {
    %c0_i32 = arith.constant 0 : i32
    %c0_i32_0 = arith.constant 0 : i32
    %c0_i32_1 = arith.constant 0 : i32
    return %c0_i32, %c0_i32_0 : i32, i32
  }
  func.func @transform_2(%arg0: i32) -> (i32, i32) {
    %c0_i32 = arith.constant 0 : i32
    %c0_i32_0 = arith.constant 0 : i32
    %c0_i32_1 = arith.constant 0 : i32
    return %c0_i32, %c0_i32_0 : i32, i32
  }
  func.func @transform_3(%arg0: i32) -> (i32, i32) {
    %c0_i32 = arith.constant 0 : i32
    %c0_i32_0 = arith.constant 0 : i32
    return %arg0, %c0_i32 : i32, i32
  }
}

</mosaic_0001>

<llo_original>
// kernel: patch_embed_forward.1
$region0: #{patch_embed_forward.1}
  #allocation0 [shape = 'u32[]', space=smem, size = 0x4, offset = 0x4, fixed_abs, tag = 'smem constant byte address 0x4 - core index']
  #allocation1 [shape = 'u32[72,128]{1,0:T(1,128)}', space=vmem, size = 0x9000, scoped, tag = 'internal scratch']
  %s0 = inlined_call_operand.vmem [shape: bf16[32,27], index: 0, kind: input, shape index: {}]
  %s1 = inlined_call_operand.vmem [shape: bf16[27,128], index: 1, kind: input, shape index: {}]
  %s2 = inlined_call_operand.vmem [shape: f32[3,128], index: 2, kind: input, shape index: {}]
  %s3 = inlined_call_operand.hbm [shape: f32[32,128], index: 3, kind: output, shape index: {}]
  %s4 = sld [smem:[#allocation0]]
  $region45: #{patch_embed_forward.1} parent=0
    _
  %s6 = ssub.s32 1, %s4
  %s7 = scalar_select 0, %s6, %s4
  $region1: #{patch_embed_forward.1} parent=0
    #allocation2 [shape = 'u8[16384]{0}', space=vmem, size = 0x4000, scoped, tag = 'output window, operand 0']
    #allocation3 [shape = 's32[2]{0}', space=sflag, size = 0x8, scoped, tag = 'scoped memory for patch_embed_forward.1']
    %8 = vsyncpa [#allocation3], 0
    %s9 = scalar_lea.sflag [#allocation3], 1
    %10 = vsyncpa %s9, 0
    loop: start=0, step=1, limit=4
    $region2: #{patch_embed_forward.1} parent=1 // loop_pre_header
      _
    $region3: #{patch_embed_forward.1} parent=1 // loop_header
      %s12 = sphi 0, %s16
      %p13 = scmp.ge.s32.totalorder %s12, 4
      %s22 = sphi 0, %s24
      %s25 = sphi 0, %s22
      %s26 = sphi 0, %s25
      %s42 = sphi 0, %s26
      %s46 = sphi 0, %s46
      %s48 = sphi 0, %s46
      %s49 = sphi 0, %s48
      %s63 = sphi 0, %s49
      %s67 = sphi 0, %s67
      %s69 = sphi 0, %s67
      %s70 = sphi 0, %s69
      %s84 = sphi 0, %s70
      %s90 = sphi 0, %s92
      %s93 = sphi 0, %s90
      %s94 = sphi 0, %s93
      %s110 = sphi 0, %s94
    $region4: #{patch_embed_forward.1} parent=1 // loop_header_branch
      %15 = sbr.rel (%p13) target = $region8
    $region5: #{patch_embed_forward.1} parent=1 // loop_body
      %s17 = ssub.s32 %s12, 1
      %s18 = ssub.s32 %s12, 2
      %s19 = sadd.s32 %s12, 1
      %s20 = ssub.s32 %s12, %s19
      %p21 = scmp.eq.s32.totalorder %s20, 0
      %s23 = sadd.s32 %s22, 1
      %s24 = scalar_select %p21, %s22, %s23
      %p27 = pneg %p21
      %p28 = scmp.eq.s32.totalorder %s12, 1
      %p29 = por %p27, %p28
      %p30 = scmp.ne.s32.totalorder %s22, %s25
      %p31 = scmp.eq.s32.totalorder %s12, 0
      %p32 = por %p30, %p31
      %p33 = scmp.ne.s32.totalorder %s22, %s25
      %p34 = scmp.eq.s32.totalorder %s17, 1
      %p35 = por %p33, %p34
      %p36 = scmp.ne.s32.totalorder %s25, %s26
      %p37 = scmp.eq.s32.totalorder %s17, 0
      %p38 = por %p36, %p37
      %p39 = scmp.ne.s32.totalorder %s25, %s26
      %p40 = scmp.eq.s32.totalorder %s18, 1
      %p41 = por %p39, %p40
      %p43 = scmp.ne.s32.totalorder %s26, %s42
      %p44 = scmp.eq.s32.totalorder %s18, 0
      %p45 = por %p43, %p44
      %s47 = sadd.s32 %s46, 1
      %p50 = scmp.eq.s32.totalorder %s12, 1
      %p51 = scmp.ne.s32.totalorder %s46, %s48
      %p52 = scmp.eq.s32.totalorder %s12, 0
      %p53 = por %p51, %p52
      %p54 = scmp.ne.s32.totalorder %s46, %s48
      %p55 = scmp.eq.s32.totalorder %s17, 1
      %p56 = por %p54, %p55
      %p57 = scmp.ne.s32.totalorder %s48, %s49
      %p58 = scmp.eq.s32.totalorder %s17, 0
      %p59 = por %p57, %p58
      %p60 = scmp.ne.s32.totalorder %s48, %s49
      %p61 = scmp.eq.s32.totalorder %s18, 1
      %p62 = por %p60, %p61
      %p64 = scmp.ne.s32.totalorder %s49, %s63
      %p65 = scmp.eq.s32.totalorder %s18, 0
      %p66 = por %p64, %p65
      %s68 = sadd.s32 %s67, 1
      %p71 = scmp.eq.s32.totalorder %s12, 1
      %p72 = scmp.ne.s32.totalorder %s67, %s69
      %p73 = scmp.eq.s32.totalorder %s12, 0
      %p74 = por %p72, %p73
      %p75 = scmp.ne.s32.totalorder %s67, %s69
      %p76 = scmp.eq.s32.totalorder %s17, 1
      %p77 = por %p75, %p76
      %p78 = scmp.ne.s32.totalorder %s69, %s70
      %p79 = scmp.eq.s32.totalorder %s17, 0
      %p80 = por %p78, %p79
      %p81 = scmp.ne.s32.totalorder %s69, %s70
      %p82 = scmp.eq.s32.totalorder %s18, 1
      %p83 = por %p81, %p82
      %p85 = scmp.ne.s32.totalorder %s70, %s84
      %p86 = scmp.eq.s32.totalorder %s18, 0
      %p87 = por %p85, %p86
      %s88 = ssub.s32 %s12, %s19
      %p89 = scmp.eq.s32.totalorder %s88, 0
      %s91 = sadd.s32 %s90, 1
      %s92 = scalar_select %p89, %s90, %s91
      %p95 = pneg %p89
      %p96 = scmp.eq.s32.totalorder %s12, 1
      %p97 = por %p95, %p96
      %p98 = scmp.ne.s32.totalorder %s90, %s93
      %p99 = scmp.eq.s32.totalorder %s12, 0
      %p100 = por %p98, %p99
      %p101 = scmp.ne.s32.totalorder %s90, %s93
      %p102 = scmp.eq.s32.totalorder %s17, 1
      %p103 = por %p101, %p102
      %p104 = scmp.ne.s32.totalorder %s93, %s94
      %p105 = scmp.eq.s32.totalorder %s17, 0
      %p106 = por %p104, %p105
      %p107 = scmp.ne.s32.totalorder %s93, %s94
      %p108 = scmp.eq.s32.totalorder %s18, 1
      %p109 = por %p107, %p108
      %p111 = scmp.ne.s32.totalorder %s94, %s110
      %p112 = scmp.eq.s32.totalorder %s18, 0
      %p113 = por %p111, %p112
      %p114 = scmp.le.s32.totalorder 1, %s12
      %p115 = scmp.lt.s32.totalorder %s12, 3
      %p116 = pnand %p114, %p115
      %p117 = pneg %p116
      // Predicated region
      $region9: #{patch_embed_forward.1} parent=5 // pred_check
        _
      $region10: #{patch_embed_forward.1} parent=5 // pred_check_branch
        %119 = sbr.rel (%p116) target = $region12
      $region11: #{patch_embed_forward.1} parent=5 // pred_region
        %s120 = ssub.s32 %s12, 1
        // Predicated region
        $region13: #{patch_embed_forward.1} parent=11 // pred_check
          %p121 = pneg %p59
        $region14: #{patch_embed_forward.1} parent=11 // pred_check_branch
          %123 = sbr.rel (%p121) target = $region16
        $region15: #{patch_embed_forward.1} parent=11 // pred_region
          _
        $region16: #{patch_embed_forward.1} parent=11 // pred_fallthru
          _
        // Predicated region
        $region17: #{patch_embed_forward.1} parent=11 // pred_check
          %p124 = pneg %p80
        $region18: #{patch_embed_forward.1} parent=11 // pred_check_branch
          %126 = sbr.rel (%p124) target = $region20
        $region19: #{patch_embed_forward.1} parent=11 // pred_region
          _
        $region20: #{patch_embed_forward.1} parent=11 // pred_fallthru
          _
      $region12: #{patch_embed_forward.1} parent=5 // pred_fallthru
        _
      %p127 = scmp.lt.s32.totalorder %s12, 2
      // Predicated region
      $region21: #{patch_embed_forward.1} parent=5 // pred_check
        %p128 = pneg %p127
      $region22: #{patch_embed_forward.1} parent=5 // pred_check_branch
        %130 = sbr.rel (%p128) target = $region24
      $region23: #{patch_embed_forward.1} parent=5 // pred_region
        // Predicated region
        $region25: #{patch_embed_forward.1} parent=23 // pred_check
          %p131 = pneg %p32
        $region26: #{patch_embed_forward.1} parent=23 // pred_check_branch
          %133 = sbr.rel (%p131) target = $region28
        $region27: #{patch_embed_forward.1} parent=23 // pred_region
          %s134 = smul.u32 2, %s12
          %p135 = scmp.lt.s32.totalorder %s134, 3
          %s136 = scalar_select %p135, %s134, 3
          %s137 = smul.addr %s136, 4
          %s138 = scalar_lea.vmem %s0, %s137
          %s139 = smul.u32 2, %s12
        $region28: #{patch_embed_forward.1} parent=23 // pred_fallthru
          _
      $region24: #{patch_embed_forward.1} parent=5 // pred_fallthru
        _
      %p140 = scmp.le.s32.totalorder 1, %s12
      %p141 = scmp.lt.s32.totalorder %s12, 3
      %p142 = pnand %p140, %p141
      %p143 = pneg %p142
      // Predicated region
      $region29: #{patch_embed_forward.1} parent=5 // pred_check
        _
      $region30: #{patch_embed_forward.1} parent=5 // pred_check_branch
        %145 = sbr.rel (%p142) target = $region32
      $region31: #{patch_embed_forward.1} parent=5 // pred_region
        %s146 = ssub.s32 %s12, 1
        %s147 = smul.u32 2, %s17
        %p148 = scmp.lt.s32.totalorder %s147, 3
        %s149 = scalar_select %p148, %s147, 3
        %s150 = smul.addr %s149, 4
        %s151 = scalar_lea.vmem %s0, %s150
        %p152 = pneg %p38
        %p153 = pneg %p35
        %p154 = pneg %p59
        %p155 = pneg %p56
        %p156 = pneg %p80
        %p157 = pneg %p77
        %p158 = pneg %p106
        %p159 = pneg %p103
        %s160 = sand.u32 %s93, 1
        %s161 = scalar_lea.sflag [#allocation3], %s160
        %s162 = sand.u32 %s93, 1
        %s163 = smul.addr %s162, 16
        %s164 = scalar_lea.vmem [#allocation2], %s163
        %s165 = smul.u32 2, %s17
        %p166 = scmp.lt.s32.totalorder %s165, 3
        %s167 = scalar_select %p166, %s165, 3
        %s168 = smul.addr %s167, 4
        %s169 = scalar_lea.vmem %s0, %s168
        %s170 = smul.u32 2, %s17
        %s171 = smul.u32 2, %s17
        %v173 = vld [vmem:[%s169] sm:$0xf]
        %v174 = vld [vmem:[%s169 + $0x4] sm:$0xf]
        %v175 = vld [vmem:[%s1] sm:$0xf]
        %v176 = vld [vmem:[%s1 + $0x4] sm:$0xf]
        %v177 = vld [vmem:[%s1 + $0x8] sm:$0xf]
        %v178 = vld [vmem:[%s1 + $0xc] sm:$0x3]
        %v179 = vld [vmem:[%s2] sm:$0x7]
        %v180 = vperm.slane %v179, 0
        %v183 = vunpack.c.l.b16 %v173
        %v184 = vunpack.c.l.b16 %v174
        %v185 = vpack.c.b16 %v184, %v183
        %v190 = vunpack.c.l.b16 %v175
        %v191 = vunpack.c.l.b16 %v176
        %v192 = vunpack.c.l.b16 %v177
        %v193 = vunpack.c.l.b16 %v178
        %v194 = vpack.c.b16 %v191, %v190
        %v195 = vpack.c.b16 %v193, %v192
        %vm197 = vcmask 220160
        %v199 = vsel %vm197, %v185, 0
        %vm201 = vcmask 1044480
        %vm202 = vcmask 1045504
        %v203 = vsel %vm201, 4294967295, 65535
        %v204 = vsel %vm202, %v203, 0
        %v206 = vand.u32 %v195, %v204
        %208 = vmatpush.bf16.msra.mxu0 0
        %209 = vmatpush.bf16.msra.mxu0 0
        %210 = vmatpush.bf16.msra.mxu0 0
        %211 = vmatpush.bf16.msra.mxu0 0
        %212 = vmatpush.bf16.msra.mxu0 0
        %213 = vmatpush.bf16.msra.mxu0 0
        %214 = vmatpush.bf16.msra.mxu0 %v206
        %215 = vmatpush.bf16.msra.mxu0 %v194
        %216 = vmatmul.bf16.gmra.mxu0 %v199
        %v217 = vpop.f32.mrf.mxu0
        %v218 = vadd.f32 %v180, %v217
        %v219 = vpop.f32.mrf.mxu0
        %v220 = vadd.f32 %v180, %v219
        %221 = vdwg.mxu0
        %222 = vadd.xlane.f32.xlu0 %v218
        %v223 = vpop.xlane.xlu0 %222
        %224 = vadd.xlane.f32.xlu0 %v220
        %v225 = vpop.xlane.xlu0 %224
        %v226 = vmul.f32 %v223, 0.0078125
        %v227 = vmul.f32 %v225, 0.0078125
        %v228 = vmul.f32 %v218, %v218
        %v229 = vmul.f32 %v220, %v220
        %230 = vadd.xlane.f32.xlu0 %v228
        %v231 = vpop.xlane.xlu0 %230
        %232 = vadd.xlane.f32.xlu0 %v229
        %v233 = vpop.xlane.xlu0 %232
        %v234 = vmul.f32 %v231, 0.0078125
        %v235 = vmul.f32 %v233, 0.0078125
        %v236 = vmul.f32 %v226, %v226
        %v237 = vmul.f32 %v227, %v227
        %v238 = vsub.f32 %v234, %v236
        %v239 = vsub.f32 %v235, %v237
        %v240 = vmax.f32 %v238, 0.0
        %v241 = vmax.f32 %v239, 0.0
        %v242 = vsub.f32 %v218, %v226
        %v243 = vsub.f32 %v220, %v227
        %v244 = vadd.f32 %v240, 1e-05
        %v245 = vadd.f32 %v241, 1e-05
        %v246 = vrsqrt.pop %v244
        %v247 = vmul.f32 %v246, %v244
        %v248 = vmul.f32 %v247, %v246
        %v249 = vmul.f32 0.5, %v248
        %v250 = vsub.f32 1.5, %v249
        %v251 = vmul.f32 %v246, %v250
        %vm252 = vweird.f32 %v244
        %vm253 = vweird.f32 %v246
        %vm254 = vmor %vm252, %vm253
        %v255 = vsel %vm254, %v246, %v251
        %v256 = vrsqrt.pop %v245
        %v257 = vmul.f32 %v256, %v245
        %v258 = vmul.f32 %v257, %v256
        %v259 = vmul.f32 0.5, %v258
        %v260 = vsub.f32 1.5, %v259
        %v261 = vmul.f32 %v256, %v260
        %vm262 = vweird.f32 %v245
        %vm263 = vweird.f32 %v256
        %vm264 = vmor %vm262, %vm263
        %v265 = vsel %vm264, %v256, %v261
        %v266 = vmul.f32 %v242, %v255
        %v267 = vmul.f32 %v243, %v265
        %v268 = vperm.slane %v179, 1
        %v269 = vmul.f32 %v266, %v268
        %v270 = vmul.f32 %v267, %v268
        %v271 = vperm.slane %v179, 2
        %v272 = vadd.f32 %v269, %v271
        %v273 = vadd.f32 %v270, %v271
        %274 = vst [vmem:[%s164] sm:$0xff] %v272
        %275 = vst [vmem:[%s164 + $0x8] sm:$0xff] %v273
        %s276 = sand.u32 %s93, 1
        %s277 = scalar_lea.sflag [#allocation3], %s276
        %s278 = sand.u32 %s93, 1
        %s279 = smul.addr %s278, 16
        %s280 = scalar_lea.vmem [#allocation2], %s279
        // Predicated region
        $region33: #{patch_embed_forward.1} parent=31 // pred_check
          %p281 = pneg %p103
        $region34: #{patch_embed_forward.1} parent=31 // pred_check_branch
          %283 = sbr.rel (%p281) target = $region36
        $region35: #{patch_embed_forward.1} parent=31 // pred_region
          %s284 = smul.u32 2, %s17
          %286 = vsyncadd %s277, 0
          %s287 = smul.addr %s284, 8
          %s288 = scalar_lea.hbm %s3, %s287
          %s289 = sshll.u32 %s280, 4
          %s290 = int_to_ptr.vmem [resolvable:$true] %s289
          %s291 = sshll.u32 %s288, 4
          %s292 = int_to_ptr.hbm [resolvable:$true] %s291
          %297 = dma.vmem_to_hbm [thread:$0]  %s290, 256, %s292, %s277, 128, 128, 8
        $region36: #{patch_embed_forward.1} parent=31 // pred_fallthru
          _
      $region32: #{patch_embed_forward.1} parent=5 // pred_fallthru
        _
      %p298 = scmp.le.s32.totalorder 2, %s12
      // Predicated region
      $region37: #{patch_embed_forward.1} parent=5 // pred_check
        %p299 = pneg %p298
      $region38: #{patch_embed_forward.1} parent=5 // pred_check_branch
        %301 = sbr.rel (%p299) target = $region40
      $region39: #{patch_embed_forward.1} parent=5 // pred_region
        %s302 = ssub.s32 %s12, 2
        // Predicated region
        $region41: #{patch_embed_forward.1} parent=39 // pred_check
          %p303 = pneg %p109
        $region42: #{patch_embed_forward.1} parent=39 // pred_check_branch
          %305 = sbr.rel (%p303) target = $region44
        $region43: #{patch_embed_forward.1} parent=39 // pred_region
          %s306 = sand.u32 %s94, 1
          %s307 = scalar_lea.sflag [#allocation3], %s306
          %s308 = sand.u32 %s94, 1
          %s309 = smul.addr %s308, 16
          %s310 = scalar_lea.vmem [#allocation2], %s309
          %312 = dma.done %s307, 256
        $region44: #{patch_embed_forward.1} parent=39 // pred_fallthru
          _
      $region40: #{patch_embed_forward.1} parent=5 // pred_fallthru
        _
    $region6: #{patch_embed_forward.1} parent=1 // loop_footer
      %s16 = sadd.s32 1, %s12
    $region7: #{patch_embed_forward.1} parent=1 // loop_footer_branch
      %11 = sbr.rel target = $region3
    $region8: #{patch_embed_forward.1} parent=1 // loop_exit
      _
    %313 = vsyncpa [#allocation3], 1
    %s314 = scalar_lea.sflag [#allocation3], 1
    %315 = vsyncpa %s314, 1

</llo_original>
